<compile_context>
chip_gen: v7x
topology: tpu7x:2x2x1
jax: 0.10.0
libtpu: 0.0.40
codegen_flags: <defaults>
</compile_context>

<pallas_src>
import jax
import jax.numpy as jnp
import numpy as np
from jax.experimental import pallas as pl
from jax.experimental.pallas import tpu as pltpu


def _encoder_block_kernel(pat_ref, w_ref, g_ref, b_ref, o_ref):
    # pat_ref: (K, M)   bf16   im2col patches, M = N*Ho*Wo (lane axis, multiple of 128 here)
    # w_ref  : (Cout, K) bf16  conv weights, columns ordered (dy, dx, ci)
    # g_ref, b_ref: (Cout, 1) f32   BatchNorm affine
    # o_ref  : (Cout, M) f32   normalized + activated output (written once)
    acc = jnp.dot(w_ref[...], pat_ref[...],
                  preferred_element_type=jnp.float32)            # one MXU push, f32 accum
    m = acc.shape[1]
    inv_m = 1.0 / m
    # Per-channel batch stats over (N, Ho, Wo) == the lane axis of acc (still in vregs).
    mean = jnp.sum(acc, axis=1, keepdims=True) * inv_m
    cen = acc - mean
    var = jnp.sum(cen * cen, axis=1, keepdims=True) * inv_m      # biased var, PyTorch train BN
    z = cen * jax.lax.rsqrt(var + 1e-5)
    z = z * g_ref[...] + b_ref[...]
    o_ref[...] = jnp.maximum(z, 0.01 * z)                        # LeakyReLU(0.01); single sweep


def _im2col(x, subsample):
    """Layout-only patch extraction in the wrapper (tiny HBM op); rows ordered (dy, dx, ci),
    columns ordered (n, oh, ow)."""
    n, cin, h, w = x.shape
    if subsample:                                   # 2x2 kernel, stride 2, VALID
        k, ho, wo = 2, h // 2, w // 2
        xs = x[:, :, :2 * ho, :2 * wo].reshape(n, cin, ho, 2, wo, 2)   # (n, ci, oh, dy, ow, dx)
        pat = jnp.transpose(xs, (3, 5, 1, 0, 2, 4))                    # (dy, dx, ci, n, oh, ow)
    else:                                           # 3x3 kernel, stride 1, pad 1
        k, ho, wo = 3, h, w
        xp = jnp.pad(x, ((0, 0), (0, 0), (1, 1), (1, 1)))
        slabs = [xp[:, :, dy:dy + h, dx:dx + w] for dy in range(3) for dx in range(3)]
        pat = jnp.transpose(jnp.stack(slabs, axis=0), (0, 2, 1, 3, 4))  # (tap, ci, n, oh, ow)
    return pat.reshape(k * k * cin, n * ho * wo), ho, wo


def gen_encoder_block(x_nchw, params, subsample):
    x = x_nchw.astype(jnp.float32)
    n, cin, h, w = x.shape
    w_hwio = params["w"]                                         # (k, k, Cin, Cout)
    k = w_hwio.shape[0]
    cout = w_hwio.shape[-1]
    kk = k * k * cin

    # (Cout, K) with column order (dy, dx, ci), matching the im2col row order.
    w_flat = jnp.transpose(w_hwio, (3, 0, 1, 2)).reshape(cout, kk).astype(jnp.bfloat16)
    gamma = params["gamma"].reshape(cout, 1).astype(jnp.float32)
    beta = params["beta"].reshape(cout, 1).astype(jnp.float32)
    # Conv bias intentionally not passed: exactly cancelled by train-mode BN mean subtraction.

    patches, ho, wo = _im2col(x, subsample)
    patches = patches.astype(jnp.bfloat16)                       # MXU-native operand dtype
    m = n * ho * wo                                              # 128 / 512 here -> lane-dense

    # Whole-output-resident BN: check the VMEM budget (tiny at these shapes).
    resident_bytes = kk * m * 2 + cout * kk * 2 + cout * m * 4
    assert resident_bytes < 24 * 1024 * 1024, "resident blocks too large for single-pass BN"
    # TODO(synk): for large N*Ho*Wo (esp. v7x's 64 MiB VMEM) fall back to a two-pass BN
    # (tiled conv + partial sum/sumsq to HBM, then a tiled normalize pass) and split the
    # batch across both v7x TensorCores with per-core partial stats.

    out_flat = pl.pallas_call(
        _encoder_block_kernel,
        out_shape=jax.ShapeDtypeStruct((cout, m), jnp.float32),
        grid=(1,),
        in_specs=[
            pl.BlockSpec((kk, m), lambda i: (0, 0)),
            pl.BlockSpec((cout, kk), lambda i: (0, 0)),
            pl.BlockSpec((cout, 1), lambda i: (0, 0)),
            pl.BlockSpec((cout, 1), lambda i: (0, 0)),
        ],
        out_specs=pl.BlockSpec((cout, m), lambda i: (0, 0)),
        compiler_params=pltpu.CompilerParams(
            dimension_semantics=("arbitrary",),
            vmem_limit_bytes=32 << 20),
    )(patches, w_flat, gamma, beta)

    # (Cout, N*Ho*Wo) -> NCHW: tiny layout-only reshape/transpose outside the kernel.
    return jnp.transpose(out_flat.reshape(cout, n, ho, wo), (1, 0, 2, 3))


# ----------------------------- parameters & reference ------------------------------
def init_params(key, in_channels, out_channels, subsample):
    k = 2 if subsample else 3
    k1, k2, k3, k4 = jax.random.split(key, 4)
    w = jax.random.normal(k1, (k, k, in_channels, out_channels), jnp.float32) * 0.1
    bias = jax.random.normal(k2, (out_channels,), jnp.float32) * 0.1   # cancelled by BN
    gamma = 1.0 + 0.1 * jax.random.normal(k3, (out_channels,), jnp.float32)
    beta = 0.1 * jax.random.normal(k4, (out_channels,), jnp.float32)
    return dict(w=w, bias=bias, gamma=gamma, beta=beta)


def reference(x_nchw, params, subsample):
    x = x_nchw.astype(jnp.float32)
    cout = params["w"].shape[-1]
    if subsample:
        y = jax.lax.conv_general_dilated(
            x, params["w"], window_strides=(2, 2), padding="VALID",
            dimension_numbers=("NCHW", "HWIO", "NCHW"))
    else:
        y = jax.lax.conv_general_dilated(
            x, params["w"], window_strides=(1, 1), padding=[(1, 1), (1, 1)],
            dimension_numbers=("NCHW", "HWIO", "NCHW"))
    y = y + params["bias"].reshape(1, cout, 1, 1)   # kept here; cancelled by BN below
    mean = jnp.mean(y, axis=(0, 2, 3), keepdims=True)
    var = jnp.mean((y - mean) ** 2, axis=(0, 2, 3), keepdims=True)
    z = (y - mean) * jax.lax.rsqrt(var + 1e-5)
    z = z * params["gamma"].reshape(1, cout, 1, 1) + params["beta"].reshape(1, cout, 1, 1)
    return jnp.maximum(z, 0.01 * z)


if __name__ == "__main__":
    key = jax.random.PRNGKey(0)
    k_x1, k_x2, k_p1, k_p2 = jax.random.split(key, 4)
    in_ch, out_ch = 4, 8
    # Tolerance: bf16 MXU operands (v5e/v6e/v7x-native) perturb the conv at the ~1e-3
    # level; BN/LeakyReLU math is f32.
    tol = dict(rtol=2e-2, atol=2e-2)

    # Case 1: subsample=True -> Conv2d(in, out, 2, 2): spatial halves.
    x1 = jax.random.normal(k_x1, (2, in_ch, 16, 16), jnp.float32)
    p1 = init_params(k_p1, in_ch, out_ch, subsample=True)
    out1 = jax.block_until_ready(gen_encoder_block(x1, p1, subsample=True))
    ref1 = reference(x1, p1, subsample=True)
    assert out1.shape == (2, out_ch, 8, 8)
    np.testing.assert_allclose(np.asarray(out1), np.asarray(ref1), **tol)

    # Case 2: subsample=False -> Conv2d(in, out, 3, 1, 1): spatial preserved.
    x2 = jax.random.normal(k_x2, (2, in_ch, 16, 16), jnp.float32)
    p2 = init_params(k_p2, in_ch, out_ch, subsample=False)
    out2 = jax.block_until_ready(gen_encoder_block(x2, p2, subsample=False))
    ref2 = reference(x2, p2, subsample=False)
    assert out2.shape == (2, out_ch, 16, 16)
    np.testing.assert_allclose(np.asarray(out2), np.asarray(ref2), **tol)

    print("KERNEL_OK")
</pallas_src>

<mosaic_0001>
module attributes {stable_mosaic.version = 11 : i64} {
  func.func @_encoder_block_kernel(%arg0: i32, %arg1: memref<16x128xbf16, #tpu.memory_space<vmem>>, %arg2: memref<8x16xbf16, #tpu.memory_space<vmem>>, %arg3: memref<8x1xf32, #tpu.memory_space<vmem>>, %arg4: memref<8x1xf32, #tpu.memory_space<vmem>>, %arg5: memref<8x128xf32, #tpu.memory_space<vmem>>) attributes {dimension_semantics = [#tpu.dimension_semantics<arbitrary>], iteration_bounds = array<i64: 1>, scalar_prefetch = 0 : i64, scratch_operands = 0 : i64, tpu.core_type = #tpu.core_type<tc>, window_params = [{pipeline_mode = #tpu.pipeline_mode<synchronous>, transform_indices = @transform_0, window_bounds = array<i64: 16, 128>}, {pipeline_mode = #tpu.pipeline_mode<synchronous>, transform_indices = @transform_1, window_bounds = array<i64: 8, 16>}, {pipeline_mode = #tpu.pipeline_mode<synchronous>, transform_indices = @transform_2, window_bounds = array<i64: 8, 1>}, {pipeline_mode = #tpu.pipeline_mode<synchronous>, transform_indices = @transform_3, window_bounds = array<i64: 8, 1>}, {pipeline_mode = #tpu.pipeline_mode<synchronous>, transform_indices = @transform_4, window_bounds = array<i64: 8, 128>}]} {
    %c0 = arith.constant 0 : index
    %c0_0 = arith.constant 0 : index
    %0 = vector.load %arg2[%c0, %c0_0] : memref<8x16xbf16, #tpu.memory_space<vmem>>, vector<8x16xbf16>
    %c0_1 = arith.constant 0 : index
    %c0_2 = arith.constant 0 : index
    %1 = vector.load %arg1[%c0_1, %c0_2] : memref<16x128xbf16, #tpu.memory_space<vmem>>, vector<16x128xbf16>
    %cst = arith.constant dense<0.000000e+00> : vector<8x128xf32>
    %2 = tpu.matmul %0, %1, %cst {dimension_numbers = #tpu.dot_dimension_numbers<[1], [0], [0], [1], [0, 0, 1, 1], [], []>} : vector<8x16xbf16>, vector<16x128xbf16>, vector<8x128xf32> -> vector<8x128xf32>
    %cst_3 = arith.constant dense<0.000000e+00> : vector<8xf32>
    %3 = vector.multi_reduction <add>, %2, %cst_3 [1] : vector<8x128xf32> to vector<8xf32>
    %4 = vector.shape_cast %3 : vector<8xf32> to vector<8x1xf32>
    %cst_4 = arith.constant 7.812500e-03 : f32
    %5 = vector.broadcast %cst_4 : f32 to vector<8x1xf32>
    %6 = arith.mulf %4, %5 : vector<8x1xf32>
    %7 = vector.broadcast %6 : vector<8x1xf32> to vector<8x128xf32>
    %8 = arith.subf %2, %7 : vector<8x128xf32>
    %9 = arith.mulf %8, %8 : vector<8x128xf32>
    %cst_5 = arith.constant dense<0.000000e+00> : vector<8xf32>
    %10 = vector.multi_reduction <add>, %9, %cst_5 [1] : vector<8x128xf32> to vector<8xf32>
    %11 = vector.shape_cast %10 : vector<8xf32> to vector<8x1xf32>
    %cst_6 = arith.constant 7.812500e-03 : f32
    %12 = vector.broadcast %cst_6 : f32 to vector<8x1xf32>
    %13 = arith.mulf %11, %12 : vector<8x1xf32>
    %cst_7 = arith.constant 9.99999974E-6 : f32
    %14 = vector.broadcast %cst_7 : f32 to vector<8x1xf32>
    %15 = arith.addf %13, %14 : vector<8x1xf32>
    %16 = math.rsqrt %15 : vector<8x1xf32>
    %17 = vector.broadcast %16 : vector<8x1xf32> to vector<8x128xf32>
    %18 = arith.mulf %8, %17 : vector<8x128xf32>
    %c0_8 = arith.constant 0 : index
    %c0_9 = arith.constant 0 : index
    %19 = vector.load %arg3[%c0_8, %c0_9] : memref<8x1xf32, #tpu.memory_space<vmem>>, vector<8x1xf32>
    %20 = vector.broadcast %19 : vector<8x1xf32> to vector<8x128xf32>
    %21 = arith.mulf %18, %20 : vector<8x128xf32>
    %c0_10 = arith.constant 0 : index
    %c0_11 = arith.constant 0 : index
    %22 = vector.load %arg4[%c0_10, %c0_11] : memref<8x1xf32, #tpu.memory_space<vmem>>, vector<8x1xf32>
    %23 = vector.broadcast %22 : vector<8x1xf32> to vector<8x128xf32>
    %24 = arith.addf %21, %23 : vector<8x128xf32>
    %cst_12 = arith.constant 0.00999999977 : f32
    %25 = vector.broadcast %cst_12 : f32 to vector<8x128xf32>
    %26 = arith.mulf %25, %24 : vector<8x128xf32>
    %27 = arith.maximumf %24, %26 : vector<8x128xf32>
    %c0_13 = arith.constant 0 : index
    %c0_14 = arith.constant 0 : index
    %28 = vector.load %arg5[%c0_13, %c0_14] : memref<8x128xf32, #tpu.memory_space<vmem>>, vector<8x128xf32>
    tpu.vector_store %arg5[%c0_13, %c0_14], %27 {strides = array<i32>} : memref<8x128xf32, #tpu.memory_space<vmem>>, vector<8x128xf32>,
    return
  }
  func.func @transform_0(%arg0: i32) -> (i32, i32) {
    %c0_i32 = arith.constant 0 : i32
    %c0_i32_0 = arith.constant 0 : i32
    %c0_i32_1 = arith.constant 0 : i32
    return %c0_i32, %c0_i32_0 : i32, i32
  }
  func.func @transform_1(%arg0: i32) -> (i32, i32) {
    %c0_i32 = arith.constant 0 : i32
    %c0_i32_0 = arith.constant 0 : i32
    %c0_i32_1 = arith.constant 0 : i32
    return %c0_i32, %c0_i32_0 : i32, i32
  }
  func.func @transform_2(%arg0: i32) -> (i32, i32) {
    %c0_i32 = arith.constant 0 : i32
    %c0_i32_0 = arith.constant 0 : i32
    %c0_i32_1 = arith.constant 0 : i32
    return %c0_i32, %c0_i32_0 : i32, i32
  }
  func.func @transform_3(%arg0: i32) -> (i32, i32) {
    %c0_i32 = arith.constant 0 : i32
    %c0_i32_0 = arith.constant 0 : i32
    %c0_i32_1 = arith.constant 0 : i32
    return %c0_i32, %c0_i32_0 : i32, i32
  }
  func.func @transform_4(%arg0: i32) -> (i32, i32) {
    %c0_i32 = arith.constant 0 : i32
    %c0_i32_0 = arith.constant 0 : i32
    %c0_i32_1 = arith.constant 0 : i32
    return %c0_i32, %c0_i32_0 : i32, i32
  }
}

</mosaic_0001>

<llo_original>
// kernel: tpu_custom_call.1
$region0: #{tpu_custom_call.1}
  #allocation0 [shape = 'u32[]', space=smem, size = 0x4, offset = 0x4, fixed_abs, tag = 'smem constant byte address 0x4 - core index']
  #allocation1 [shape = 'u32[144,128]{1,0:T(1,128)}', space=vmem, size = 0x12000, scoped, tag = 'internal scratch']
  %s0 = inlined_call_operand.vmem [shape: bf16[16,128], index: 0, kind: input, shape index: {}]
  %s1 = inlined_call_operand.vmem [shape: bf16[8,16], index: 1, kind: input, shape index: {}]
  %s2 = inlined_call_operand.vmem [shape: f32[8,1], index: 2, kind: input, shape index: {}]
  %s3 = inlined_call_operand.vmem [shape: f32[8,1], index: 3, kind: input, shape index: {}]
  %s4 = inlined_call_operand.hbm [shape: f32[8,128], index: 4, kind: output, shape index: {}]
  %s5 = sld [smem:[#allocation0]]
  $region26: #{tpu_custom_call.1} parent=0
    _
  %s7 = ssub.s32 1, %s5
  %s8 = scalar_select 0, %s7, %s5
  $region1: #{tpu_custom_call.1} parent=0
    #allocation2 [shape = 'u8[4096]{0}', space=vmem, size = 0x1000, scoped, tag = 'output window, operand 0, single buffered']
    #allocation3 [shape = 's32[1]{0}', space=sflag, size = 0x4, scoped, tag = 'scoped memory for tpu_custom_call.1']
    %9 = vsyncpa [#allocation3], 0
    // Predicated region
    $region2: #{tpu_custom_call.1} parent=1 // pred_check
      _
    $region3: #{tpu_custom_call.1} parent=1 // pred_check_branch
      %11 = sbr.rel (0) target = $region5
    $region4: #{tpu_custom_call.1} parent=1 // pred_region
      _
    $region5: #{tpu_custom_call.1} parent=1 // pred_fallthru
      _
    // Predicated region
    $region6: #{tpu_custom_call.1} parent=1 // pred_check
      _
    $region7: #{tpu_custom_call.1} parent=1 // pred_check_branch
      %13 = sbr.rel (0) target = $region9
    $region8: #{tpu_custom_call.1} parent=1 // pred_region
      _
    $region9: #{tpu_custom_call.1} parent=1 // pred_fallthru
      _
    // Predicated region
    $region10: #{tpu_custom_call.1} parent=1 // pred_check
      _
    $region11: #{tpu_custom_call.1} parent=1 // pred_check_branch
      %15 = sbr.rel (0) target = $region13
    $region12: #{tpu_custom_call.1} parent=1 // pred_region
      _
    $region13: #{tpu_custom_call.1} parent=1 // pred_fallthru
      _
    // Predicated region
    $region14: #{tpu_custom_call.1} parent=1 // pred_check
      _
    $region15: #{tpu_custom_call.1} parent=1 // pred_check_branch
      %17 = sbr.rel (0) target = $region17
    $region16: #{tpu_custom_call.1} parent=1 // pred_region
      _
    $region17: #{tpu_custom_call.1} parent=1 // pred_fallthru
      _
    %v19 = vld [vmem:[%s1] sm:$0xf]
    %v20 = vld [vmem:[%s0] sm:$0xf]
    %v21 = vld [vmem:[%s0 + $0x4] sm:$0xf]
    %v24 = vunpack.c.l.b16 %v20
    %v25 = vunpack.c.l.b16 %v21
    %v26 = vpack.c.b16 %v25, %v24
    %vm28 = vcmask 130048
    %v30 = vsel %vm28, %v19, 0
    %32 = vmatprep.subr.bf16.mxu0 0
    %33 = vmatpush1.bf16.msra.mxu0 %v26
    %34 = vmatprep.subr.bf16.mxu0 0
    %35 = vmatpush1.bf16.msra.mxu0 0
    %36 = vmatprep.subr.bf16.mxu0 0
    %37 = vmatpush1.bf16.msra.mxu0 0
    %38 = vmatprep.subr.bf16.mxu0 0
    %39 = vmatpush1.bf16.msra.mxu0 0
    %40 = vmatprep.subr.bf16.mxu0 0
    %41 = vmatpush1.bf16.msra.mxu0 0
    %42 = vmatprep.subr.bf16.mxu0 0
    %43 = vmatpush1.bf16.msra.mxu0 0
    %44 = vmatprep.subr.bf16.mxu0 0
    %45 = vmatpush1.bf16.msra.mxu0 0
    %46 = vmatprep.subr.bf16.mxu0 0
    %47 = vmatpush1.bf16.msra.mxu0 0
    %48 = vmatprep.subr.bf16.mxu0 0
    %49 = vmatpush1.bf16.msra.mxu0 0
    %50 = vmatprep.subr.bf16.mxu0 0
    %51 = vmatpush1.bf16.msra.mxu0 0
    %52 = vmatprep.subr.bf16.mxu0 0
    %53 = vmatpush1.bf16.msra.mxu0 0
    %54 = vmatprep.subr.bf16.mxu0 0
    %55 = vmatpush1.bf16.msra.mxu0 0
    %56 = vmatprep.subr.bf16.mxu0 0
    %57 = vmatpush1.bf16.msra.mxu0 0
    %58 = vmatprep.subr.bf16.mxu0 0
    %59 = vmatpush1.bf16.msra.mxu0 0
    %60 = vmatprep.subr.bf16.mxu0 0
    %61 = vmatpush1.bf16.msra.mxu0 0
    %62 = vmatprep.subr.bf16.mxu0 0
    %63 = vmatpush1.bf16.msra.mxu0 0
    %64 = vmatprep.mubr.bf16.mxu0 0
    %65 = vmatmul.mubr.bf16.gmra.mrb[0].mxu0 %v30
    %v66 = vpop.f32.mrb[0].mxu0
    %v67 = vadd.f32 0.0, %v66
    %v68 = vpop.f32.mrb[0].mxu0
    %v69 = vpop.f32.mrb[0].mxu0
    %v70 = vpop.f32.mrb[0].mxu0
    %71 = vdwg.mxu0
    %72 = vadd.xlane.f32.xlu0 %v67
    %v73 = vpop.xlane.xlu0 %72
    %v74 = vmul.f32 %v73, 0.0078125
    %v75 = vsub.f32 %v67, %v74
    %v76 = vmul.f32 %v75, %v75
    %77 = vadd.xlane.f32.xlu0 %v76
    %v78 = vpop.xlane.xlu0 %77
    %v79 = vmul.f32 %v78, 0.0078125
    %v80 = vadd.f32 %v79, 1e-05
    %v81 = vrsqrt.pop %v80
    %v82 = vmul.f32 %v75, %v81
    %v83 = vld [vmem:[%s2] sm:$0xff]
    %85 = vset.pattern.permute.xlu0 0
    %86 = vperm.xlu0 %85, %v83
    %v87 = vpop.permute.xlu0 %86
    %v89 = vmul.f32 %v82, %v87
    %v90 = vld [vmem:[%s3] sm:$0xff]
    %92 = vset.pattern.permute.xlu0 0
    %93 = vperm.xlu0 %92, %v90
    %v94 = vpop.permute.xlu0 %93
    %v96 = vadd.f32 %v89, %v94
    %v97 = vmul.f32 %v96, 0.01
    %v98 = vmax.f32 %v96, %v97
    %99 = vst [vmem:[#allocation2] sm:$0xff] %v98
    // Predicated region
    $region18: #{tpu_custom_call.1} parent=1 // pred_check
      _
    $region19: #{tpu_custom_call.1} parent=1 // pred_check_branch
      %101 = sbr.rel (0) target = $region21
    $region20: #{tpu_custom_call.1} parent=1 // pred_region
      %s103 = ssub.s32 128, 128
      %104 = vsyncadd [#allocation3], %s103
      %s106 = sshll.u32 [#allocation2], 4
      %s107 = int_to_ptr.vmem [resolvable:$true] %s106
      %109 = dma.vmem_to_hbm [thread:$0]  %s107, 128, %s4, [#allocation3]
    $region21: #{tpu_custom_call.1} parent=1 // pred_fallthru
      _
    // Predicated region
    $region22: #{tpu_custom_call.1} parent=1 // pred_check
      _
    $region23: #{tpu_custom_call.1} parent=1 // pred_check_branch
      %111 = sbr.rel (0) target = $region25
    $region24: #{tpu_custom_call.1} parent=1 // pred_region
      %112 = dma.done [#allocation3], 128
    $region25: #{tpu_custom_call.1} parent=1 // pred_fallthru
      _
    %113 = vsyncpa [#allocation3], 1

</llo_original>
